<compile_context>
chip_gen: v7x
topology: tpu7x:2x2x1
jax: 0.10.0
libtpu: 0.0.40
codegen_flags: <defaults>
</compile_context>

<pallas_src>
import functools

import jax
import jax.numpy as jnp
from jax.experimental import pallas as pl
from jax.experimental.pallas import tpu as pltpu

_BN_EPS = 1e-5
_LANE = 128


def _rup(n, m):
    return ((n + m - 1) // m) * m


def _pad2d(a, rows, cols):
    r, c = a.shape
    return jnp.pad(a, ((0, rows - r), (0, cols - c)))


# ----------------------------- Pallas kernel --------------------------------


def _make_ffn_kernel(num_hidden):
    """Fused kernel: h = ReLU(x @ W1' + c1) -> ... -> logits = h @ Wout + bout."""

    def kernel(*refs):
        x_ref = refs[0]                        # [TB, Din]    f32 (unpadded lanes)
        o_ref = refs[-1]                       # [TB, C_pad]  bf16
        h = x_ref[...].astype(jnp.bfloat16)    # cast in-kernel, no HBM pre-pass
        for li in range(num_hidden):
            wt = refs[1 + 2 * li][...]         # [prev, h_pad] bf16 (BN scale folded)
            c = refs[2 + 2 * li][...]          # [1, h_pad]    f32  (folded shift)
            z = jnp.dot(h, wt, preferred_element_type=jnp.float32) + c
            # ReLU in f32; eval-mode Dropout is the identity.
            h = jnp.maximum(z, 0.0).astype(jnp.bfloat16)
        wt = refs[1 + 2 * num_hidden][...]     # [prev, C_pad] bf16
        b = refs[2 + 2 * num_hidden][...]      # [1, C_pad]    f32
        logits = jnp.dot(h, wt, preferred_element_type=jnp.float32) + b
        o_ref[...] = logits.astype(o_ref.dtype)
        # TODO(synk): training-mode Dropout (random mask) and BN batch-stats
        # are not implemented; this is the eval/inference forward pass.

    return kernel


# ------------------------- parameter preparation ----------------------------


def prepare_params(params):
    """Fold BN into Linear, transpose, pad feature dims to 128, cast to bf16.

    Done ONCE; the returned arrays are what the fused kernel consumes.
    The first layer's contraction dim stays at input_dim (x is fed unpadded);
    every later contraction dim equals the previous layer's 128-padded width,
    whose extra activation columns are exactly zero.
    """
    hidden_layers, (w_out, b_out) = params
    input_dim = hidden_layers[0][0].shape[1] if hidden_layers else w_out.shape[1]
    prev_pad = input_dim  # unpadded: matches the raw x block fed to the kernel

    args = []
    for (w, b, gamma, beta, mean, var) in hidden_layers:
        hdim = w.shape[0]
        hpad = _rup(hdim, _LANE)
        a = gamma * jax.lax.rsqrt(var + _BN_EPS)          # [hdim]
        wt = (w * a[:, None]).T                           # [prev, hdim], BN scale folded
        c = beta + (b - mean) * a                         # folded bias/shift
        args.append(_pad2d(wt, prev_pad, hpad).astype(jnp.bfloat16))
        args.append(_pad2d(c.reshape(1, hdim), 1, hpad).astype(jnp.float32))
        prev_pad = hpad

    ncls = w_out.shape[0]
    cpad = _rup(ncls, _LANE)
    args.append(_pad2d(w_out.T, prev_pad, cpad).astype(jnp.bfloat16))
    args.append(_pad2d(b_out.reshape(1, ncls), 1, cpad).astype(jnp.float32))

    return {
        "args": tuple(args),
        "num_hidden": len(hidden_layers),
        "input_dim": input_dim,
        "num_classes": ncls,
    }


# -------------------------------- forward -----------------------------------


def _choose_tile_b(B):
    """Batch-tile rows.

    Large B: 1024-row tiles amortize the ~0.35 us per-grid-step overhead.
    Medium B: >=2 tiles (16-row multiples, bf16 sublane packing) so v7x's two
    TensorCores both get work through the "parallel" batch axis.
    Tiny B (<=16): a single block that exactly covers the batch.
    """
    if B <= 16:
        return B
    if B >= 2048:
        return 1024
    return _rup(pl.cdiv(B, 2), 16)


@functools.partial(jax.jit, static_argnames=("num_hidden", "num_classes"))
def _forward_impl(x, args, *, num_hidden, num_classes):
    B, din = x.shape
    c_pad = args[-1].shape[1]
    tb = _choose_tile_b(B)
    grid = pl.cdiv(B, tb)

    # x: full-extent last dim (legal even if din < 128), batch tiled, no padding.
    in_specs = [pl.BlockSpec((tb, din), lambda i: (i, 0))]
    for a in args:
        # Grid-invariant whole-array blocks: weights stay resident in VMEM.
        in_specs.append(pl.BlockSpec(a.shape, lambda i: (0, 0)))
    out_spec = pl.BlockSpec((tb, c_pad), lambda i: (i, 0))

    # Explicit VMEM budget: double-buffered x/out tiles + resident weights,
    # 1.5x + 4 MiB headroom, clamped to v7x's 64 MiB physical VMEM.
    weight_bytes = sum(int(a.size) * a.dtype.itemsize for a in args)
    tile_bytes = 2 * tb * din * x.dtype.itemsize + 2 * tb * c_pad * 2
    vmem_limit = max(
        16 << 20,
        min(int(1.5 * (tile_bytes + 2 * weight_bytes)) + (4 << 20), 64 << 20),
    )

    out = pl.pallas_call(
        _make_ffn_kernel(num_hidden),
        out_shape=jax.ShapeDtypeStruct((B, c_pad), jnp.bfloat16),
        grid=(grid,),
        in_specs=in_specs,
        out_specs=out_spec,
        compiler_params=pltpu.CompilerParams(
            dimension_semantics=("parallel",),   # batch axis -> megacore / 2-TC
            vmem_limit_bytes=vmem_limit),
    )(x, *args)
    # Slice the real classes out of the 128-lane padded (bf16) logits.
    return out[:, :num_classes].astype(jnp.float32)


def ffn_classifier_forward(x, prepared):
    return _forward_impl(
        x, prepared["args"],
        num_hidden=prepared["num_hidden"],
        num_classes=prepared["num_classes"],
    )


# --------------------------- deterministic init ------------------------------


def init_params(key, input_dim, hidden_dims, num_classes):
    hidden_layers = []
    prev = input_dim
    for hdim in hidden_dims:
        key, kw, km, kv, kg, kb = jax.random.split(key, 6)
        bound = 1.0 / jnp.sqrt(prev)
        w = jax.random.uniform(kw, (hdim, prev), jnp.float32, -bound, bound)
        b = jnp.zeros((hdim,), jnp.float32)
        gamma = 1.0 + 0.1 * jax.random.normal(kg, (hdim,), jnp.float32)
        beta = 0.1 * jax.random.normal(kb, (hdim,), jnp.float32)
        mean = 0.05 * jax.random.normal(km, (hdim,), jnp.float32)
        var = 1.0 + 0.1 * jax.random.uniform(kv, (hdim,), jnp.float32)
        hidden_layers.append((w, b, gamma, beta, mean, var))
        prev = hdim
    key, kw = jax.random.split(key)
    bound = 1.0 / jnp.sqrt(prev)
    w_out = jax.random.uniform(kw, (num_classes, prev), jnp.float32, -bound, bound)
    b_out = jnp.zeros((num_classes,), jnp.float32)
    return hidden_layers, (w_out, b_out)


def reference_forward(x, params):
    """Pure-JAX f32 reference with the original module semantics (eval mode)."""
    hidden_layers, (w_out, b_out) = params
    h = x
    for (w, b, gamma, beta, mean, var) in hidden_layers:
        z = h @ w.T + b
        z = (z - mean) * jax.lax.rsqrt(var + _BN_EPS) * gamma + beta
        h = jnp.maximum(z, 0.0)
    return h @ w_out.T + b_out


# ----------------------------------- main ------------------------------------


if __name__ == "__main__":
    key = jax.random.PRNGKey(0)
    B, input_dim, hidden_dims, num_classes = 8, 32, (64, 32), 4

    key, kx, kp = jax.random.split(key, 3)
    x = jax.random.normal(kx, (B, input_dim), jnp.float32)
    params = init_params(kp, input_dim, hidden_dims, num_classes)

    prepared = prepare_params(params)          # one-time fold/transpose/pad/cast
    out = ffn_classifier_forward(x, prepared)
    out = jax.block_until_ready(out)

    ref = reference_forward(x, params)
    assert out.shape == (B, num_classes)
    # bf16 matmul operands + bf16 logits writeback, f32 MXU accumulation.
    assert jnp.allclose(out, ref, atol=5e-2, rtol=5e-2), "mismatch vs reference"
    print("KERNEL_OK")
</pallas_src>

<mosaic_0001>
module attributes {stable_mosaic.version = 11 : i64} {
  func.func @kernel(%arg0: i32, %arg1: memref<8x32xf32, #tpu.memory_space<vmem>>, %arg2: memref<32x128xbf16, #tpu.memory_space<vmem>>, %arg3: memref<1x128xf32, #tpu.memory_space<vmem>>, %arg4: memref<128x128xbf16, #tpu.memory_space<vmem>>, %arg5: memref<1x128xf32, #tpu.memory_space<vmem>>, %arg6: memref<128x128xbf16, #tpu.memory_space<vmem>>, %arg7: memref<1x128xf32, #tpu.memory_space<vmem>>, %arg8: memref<8x128xbf16, #tpu.memory_space<vmem>>) attributes {dimension_semantics = [#tpu.dimension_semantics<parallel>], iteration_bounds = array<i64: 1>, scalar_prefetch = 0 : i64, scratch_operands = 0 : i64, tpu.core_type = #tpu.core_type<tc>, window_params = [{transform_indices = @transform_0, window_bounds = array<i64: 8, 32>}, {pipeline_mode = #tpu.pipeline_mode<synchronous>, transform_indices = @transform_1, window_bounds = array<i64: 32, 128>}, {pipeline_mode = #tpu.pipeline_mode<synchronous>, transform_indices = @transform_2, window_bounds = array<i64: 1, 128>}, {pipeline_mode = #tpu.pipeline_mode<synchronous>, transform_indices = @transform_3, window_bounds = array<i64: 128, 128>}, {pipeline_mode = #tpu.pipeline_mode<synchronous>, transform_indices = @transform_4, window_bounds = array<i64: 1, 128>}, {pipeline_mode = #tpu.pipeline_mode<synchronous>, transform_indices = @transform_5, window_bounds = array<i64: 128, 128>}, {pipeline_mode = #tpu.pipeline_mode<synchronous>, transform_indices = @transform_6, window_bounds = array<i64: 1, 128>}, {transform_indices = @transform_7, window_bounds = array<i64: 8, 128>}]} {
    %c0 = arith.constant 0 : index
    %c0_0 = arith.constant 0 : index
    %0 = vector.load %arg1[%c0, %c0_0] : memref<8x32xf32, #tpu.memory_space<vmem>>, vector<8x32xf32>
    %1 = arith.truncf %0 : vector<8x32xf32> to vector<8x32xbf16>
    %c0_1 = arith.constant 0 : index
    %c0_2 = arith.constant 0 : index
    %2 = vector.load %arg2[%c0_1, %c0_2] : memref<32x128xbf16, #tpu.memory_space<vmem>>, vector<32x128xbf16>
    %c0_3 = arith.constant 0 : index
    %c0_4 = arith.constant 0 : index
    %3 = vector.load %arg3[%c0_3, %c0_4] : memref<1x128xf32, #tpu.memory_space<vmem>>, vector<1x128xf32>
    %cst = arith.constant dense<0.000000e+00> : vector<8x128xf32>
    %4 = tpu.matmul %1, %2, %cst {dimension_numbers = #tpu.dot_dimension_numbers<[1], [0], [0], [1], [0, 0, 1, 1], [], []>} : vector<8x32xbf16>, vector<32x128xbf16>, vector<8x128xf32> -> vector<8x128xf32>
    %5 = vector.broadcast %3 : vector<1x128xf32> to vector<8x128xf32>
    %6 = arith.addf %4, %5 : vector<8x128xf32>
    %cst_5 = arith.constant 0.000000e+00 : f32
    %7 = vector.broadcast %cst_5 : f32 to vector<8x128xf32>
    %8 = arith.maximumf %6, %7 : vector<8x128xf32>
    %9 = arith.truncf %8 : vector<8x128xf32> to vector<8x128xbf16>
    %c0_6 = arith.constant 0 : index
    %c0_7 = arith.constant 0 : index
    %10 = vector.load %arg4[%c0_6, %c0_7] : memref<128x128xbf16, #tpu.memory_space<vmem>>, vector<128x128xbf16>
    %c0_8 = arith.constant 0 : index
    %c0_9 = arith.constant 0 : index
    %11 = vector.load %arg5[%c0_8, %c0_9] : memref<1x128xf32, #tpu.memory_space<vmem>>, vector<1x128xf32>
    %cst_10 = arith.constant dense<0.000000e+00> : vector<8x128xf32>
    %12 = tpu.matmul %9, %10, %cst_10 {dimension_numbers = #tpu.dot_dimension_numbers<[1], [0], [0], [1], [0, 0, 1, 1], [], []>} : vector<8x128xbf16>, vector<128x128xbf16>, vector<8x128xf32> -> vector<8x128xf32>
    %13 = vector.broadcast %11 : vector<1x128xf32> to vector<8x128xf32>
    %14 = arith.addf %12, %13 : vector<8x128xf32>
    %cst_11 = arith.constant 0.000000e+00 : f32
    %15 = vector.broadcast %cst_11 : f32 to vector<8x128xf32>
    %16 = arith.maximumf %14, %15 : vector<8x128xf32>
    %17 = arith.truncf %16 : vector<8x128xf32> to vector<8x128xbf16>
    %c0_12 = arith.constant 0 : index
    %c0_13 = arith.constant 0 : index
    %18 = vector.load %arg6[%c0_12, %c0_13] : memref<128x128xbf16, #tpu.memory_space<vmem>>, vector<128x128xbf16>
    %c0_14 = arith.constant 0 : index
    %c0_15 = arith.constant 0 : index
    %19 = vector.load %arg7[%c0_14, %c0_15] : memref<1x128xf32, #tpu.memory_space<vmem>>, vector<1x128xf32>
    %cst_16 = arith.constant dense<0.000000e+00> : vector<8x128xf32>
    %20 = tpu.matmul %17, %18, %cst_16 {dimension_numbers = #tpu.dot_dimension_numbers<[1], [0], [0], [1], [0, 0, 1, 1], [], []>} : vector<8x128xbf16>, vector<128x128xbf16>, vector<8x128xf32> -> vector<8x128xf32>
    %21 = vector.broadcast %19 : vector<1x128xf32> to vector<8x128xf32>
    %22 = arith.addf %20, %21 : vector<8x128xf32>
    %23 = arith.truncf %22 : vector<8x128xf32> to vector<8x128xbf16>
    %c0_17 = arith.constant 0 : index
    %c0_18 = arith.constant 0 : index
    %24 = vector.load %arg8[%c0_17, %c0_18] : memref<8x128xbf16, #tpu.memory_space<vmem>>, vector<8x128xbf16>
    tpu.vector_store %arg8[%c0_17, %c0_18], %23 {strides = array<i32>} : memref<8x128xbf16, #tpu.memory_space<vmem>>, vector<8x128xbf16>,
    return
  }
  func.func @transform_0(%arg0: i32) -> (i32, i32) {
    %c0_i32 = arith.constant 0 : i32
    %c0_i32_0 = arith.constant 0 : i32
    return %arg0, %c0_i32 : i32, i32
  }
  func.func @transform_1(%arg0: i32) -> (i32, i32) {
    %c0_i32 = arith.constant 0 : i32
    %c0_i32_0 = arith.constant 0 : i32
    %c0_i32_1 = arith.constant 0 : i32
    return %c0_i32, %c0_i32_0 : i32, i32
  }
  func.func @transform_2(%arg0: i32) -> (i32, i32) {
    %c0_i32 = arith.constant 0 : i32
    %c0_i32_0 = arith.constant 0 : i32
    %c0_i32_1 = arith.constant 0 : i32
    return %c0_i32, %c0_i32_0 : i32, i32
  }
  func.func @transform_3(%arg0: i32) -> (i32, i32) {
    %c0_i32 = arith.constant 0 : i32
    %c0_i32_0 = arith.constant 0 : i32
    %c0_i32_1 = arith.constant 0 : i32
    return %c0_i32, %c0_i32_0 : i32, i32
  }
  func.func @transform_4(%arg0: i32) -> (i32, i32) {
    %c0_i32 = arith.constant 0 : i32
    %c0_i32_0 = arith.constant 0 : i32
    %c0_i32_1 = arith.constant 0 : i32
    return %c0_i32, %c0_i32_0 : i32, i32
  }
  func.func @transform_5(%arg0: i32) -> (i32, i32) {
    %c0_i32 = arith.constant 0 : i32
    %c0_i32_0 = arith.constant 0 : i32
    %c0_i32_1 = arith.constant 0 : i32
    return %c0_i32, %c0_i32_0 : i32, i32
  }
  func.func @transform_6(%arg0: i32) -> (i32, i32) {
    %c0_i32 = arith.constant 0 : i32
    %c0_i32_0 = arith.constant 0 : i32
    %c0_i32_1 = arith.constant 0 : i32
    return %c0_i32, %c0_i32_0 : i32, i32
  }
  func.func @transform_7(%arg0: i32) -> (i32, i32) {
    %c0_i32 = arith.constant 0 : i32
    %c0_i32_0 = arith.constant 0 : i32
    return %arg0, %c0_i32 : i32, i32
  }
}

</mosaic_0001>

<llo_original>
// kernel: _forward_impl.1
$region0: #{_forward_impl.1}
  #allocation0 [shape = 'u32[]', space=smem, size = 0x4, offset = 0x4, fixed_abs, tag = 'smem constant byte address 0x4 - core index']
  #allocation1 [shape = 'u32[144,128]{1,0:T(1,128)}', space=vmem, size = 0x12000, scoped, tag = 'internal scratch']
  %s0 = inlined_call_operand.hbm [shape: f32[8,32], index: 0, kind: input, shape index: {}]
  %s1 = inlined_call_operand.hbm [shape: bf16[32,128], index: 1, kind: input, shape index: {}]
  %s2 = inlined_call_operand.vmem [shape: f32[1,128], index: 2, kind: input, shape index: {}]
  %s3 = inlined_call_operand.hbm [shape: bf16[128,128], index: 3, kind: input, shape index: {}]
  %s4 = inlined_call_operand.vmem [shape: f32[1,128], index: 4, kind: input, shape index: {}]
  %s5 = inlined_call_operand.hbm [shape: bf16[128,128], index: 5, kind: input, shape index: {}]
  %s6 = inlined_call_operand.vmem [shape: f32[1,128], index: 6, kind: input, shape index: {}]
  %s7 = inlined_call_operand.vmem [shape: bf16[8,128], index: 7, kind: output, shape index: {}]
  %s8 = sld [smem:[#allocation0]]
  $region54: #{_forward_impl.1} parent=0
    _
  %s10 = ssub.s32 1, %s8
  %s11 = scalar_select 0, %s10, %s8
  $region1: #{_forward_impl.1} parent=0
    #allocation2 [shape = 'u8[4096]{0}', space=vmem, size = 0x1000, scoped, tag = 'input window, operand 0, single buffered']
    #allocation3 [shape = 's32[1]{0}', space=sflag, size = 0x4, scoped, tag = 'scoped memory for _forward_impl.1']
    #allocation4 [shape = 'u8[8192]{0}', space=vmem, size = 0x2000, scoped, tag = 'input window, operand 1, single buffered']
    #allocation5 [shape = 's32[1]{0}', space=sflag, size = 0x4, scoped, tag = 'scoped memory for _forward_impl.1']
    #allocation6 [shape = 'u8[32768]{0}', space=vmem, size = 0x8000, scoped, tag = 'input window, operand 3, single buffered']
    #allocation7 [shape = 'u8[32768]{0}', space=vmem, size = 0x8000, scoped, tag = 'input window, operand 5, single buffered']
    #allocation8 [shape = 's32[1]{0}', space=sflag, size = 0x4, scoped, tag = 'scoped memory for _forward_impl.1']
    %12 = vsyncpa [#allocation3], 0
    %13 = vsyncpa [#allocation5], 0
    %14 = vsyncpa [#allocation8], 0
    // Predicated region
    $region2: #{_forward_impl.1} parent=1 // pred_check
      _
    $region3: #{_forward_impl.1} parent=1 // pred_check_branch
      %16 = sbr.rel (0) target = $region5
    $region4: #{_forward_impl.1} parent=1 // pred_region
      %s18 = ssub.s32 128, 128
      %19 = vsyncadd [#allocation3], %s18
      %s21 = sshll.u32 [#allocation2], 4
      %s22 = int_to_ptr.vmem [resolvable:$true] %s21
      %24 = dma.hbm_to_vmem [thread:$0]  %s0, 128, %s22, [#allocation3]
    $region5: #{_forward_impl.1} parent=1 // pred_fallthru
      _
    // Predicated region
    $region6: #{_forward_impl.1} parent=1 // pred_check
      _
    $region7: #{_forward_impl.1} parent=1 // pred_check_branch
      %26 = sbr.rel (0) target = $region9
    $region8: #{_forward_impl.1} parent=1 // pred_region
      %s28 = ssub.s32 256, 256
      %29 = vsyncadd [#allocation5], %s28
      %s30 = sshll.u32 [#allocation4], 4
      %s31 = int_to_ptr.vmem [resolvable:$true] %s30
      %36 = dma.hbm_to_vmem [thread:$0]  %s1, 256, %s31, [#allocation5], 64, 64, 4
    $region9: #{_forward_impl.1} parent=1 // pred_fallthru
      _
    // Predicated region
    $region10: #{_forward_impl.1} parent=1 // pred_check
      _
    $region11: #{_forward_impl.1} parent=1 // pred_check_branch
      %38 = sbr.rel (0) target = $region13
    $region12: #{_forward_impl.1} parent=1 // pred_region
      _
    $region13: #{_forward_impl.1} parent=1 // pred_fallthru
      _
    // Predicated region
    $region14: #{_forward_impl.1} parent=1 // pred_check
      _
    $region15: #{_forward_impl.1} parent=1 // pred_check_branch
      %40 = sbr.rel (0) target = $region17
    $region16: #{_forward_impl.1} parent=1 // pred_region
      %s42 = ssub.s32 1024, 1024
      %43 = vsyncadd [#allocation5], %s42
      %s44 = sshll.u32 [#allocation6], 4
      %s45 = int_to_ptr.vmem [resolvable:$true] %s44
      %50 = dma.hbm_to_vmem [thread:$0]  %s3, 1024, %s45, [#allocation5], 64, 64, 4
    $region17: #{_forward_impl.1} parent=1 // pred_fallthru
      _
    // Predicated region
    $region18: #{_forward_impl.1} parent=1 // pred_check
      _
    $region19: #{_forward_impl.1} parent=1 // pred_check_branch
      %52 = sbr.rel (0) target = $region21
    $region20: #{_forward_impl.1} parent=1 // pred_region
      _
    $region21: #{_forward_impl.1} parent=1 // pred_fallthru
      _
    // Predicated region
    $region22: #{_forward_impl.1} parent=1 // pred_check
      _
    $region23: #{_forward_impl.1} parent=1 // pred_check_branch
      %54 = sbr.rel (0) target = $region25
    $region24: #{_forward_impl.1} parent=1 // pred_region
      %s56 = ssub.s32 1024, 1024
      %57 = vsyncadd [#allocation8], %s56
      %s58 = sshll.u32 [#allocation7], 4
      %s59 = int_to_ptr.vmem [resolvable:$true] %s58
      %64 = dma.hbm_to_vmem [thread:$0]  %s5, 1024, %s59, [#allocation8], 64, 64, 4
    $region25: #{_forward_impl.1} parent=1 // pred_fallthru
      _
    // Predicated region
    $region26: #{_forward_impl.1} parent=1 // pred_check
      _
    $region27: #{_forward_impl.1} parent=1 // pred_check_branch
      %66 = sbr.rel (0) target = $region29
    $region28: #{_forward_impl.1} parent=1 // pred_region
      _
    $region29: #{_forward_impl.1} parent=1 // pred_fallthru
      _
    // Predicated region
    $region30: #{_forward_impl.1} parent=1 // pred_check
      _
    $region31: #{_forward_impl.1} parent=1 // pred_check_branch
      %68 = sbr.rel (0) target = $region33
    $region32: #{_forward_impl.1} parent=1 // pred_region
      %69 = dma.done [#allocation3], 128
    $region33: #{_forward_impl.1} parent=1 // pred_fallthru
      _
    // Predicated region
    $region34: #{_forward_impl.1} parent=1 // pred_check
      _
    $region35: #{_forward_impl.1} parent=1 // pred_check_branch
      %71 = sbr.rel (0) target = $region37
    $region36: #{_forward_impl.1} parent=1 // pred_region
      %72 = dma.done [#allocation5], 256
    $region37: #{_forward_impl.1} parent=1 // pred_fallthru
      _
    // Predicated region
    $region38: #{_forward_impl.1} parent=1 // pred_check
      _
    $region39: #{_forward_impl.1} parent=1 // pred_check_branch
      %74 = sbr.rel (0) target = $region41
    $region40: #{_forward_impl.1} parent=1 // pred_region
      %75 = dma.done [#allocation5], 1024
    $region41: #{_forward_impl.1} parent=1 // pred_fallthru
      _
    // Predicated region
    $region42: #{_forward_impl.1} parent=1 // pred_check
      _
    $region43: #{_forward_impl.1} parent=1 // pred_check_branch
      %77 = sbr.rel (0) target = $region45
    $region44: #{_forward_impl.1} parent=1 // pred_region
      %78 = dma.done [#allocation8], 1024
    $region45: #{_forward_impl.1} parent=1 // pred_fallthru
      _
    %v80 = vld [vmem:[#allocation2] sm:$0xff]
    %v81 = vpack.c.bf16 %v80, %v80
    %v82 = vld [vmem:[#allocation4] sm:$0xf]
    %v83 = vld [vmem:[#allocation4 + $0x4] sm:$0xf]
    %v84 = vld [vmem:[#allocation4 + $0x8] sm:$0xf]
    %v85 = vld [vmem:[#allocation4 + $0xc] sm:$0xf]
    %v86 = vld [vmem:[%s2] sm:$0x1]
    %v88 = vlaneseq
    %v89 = vshrl.u32 %v88, 7
    %v90 = vsub.s32 0, %v89
    %v91 = vrot.slane %v86, %v90
    %v97 = vunpack.c.l.b16 %v82
    %v98 = vunpack.c.l.b16 %v83
    %v99 = vunpack.c.l.b16 %v84
    %v100 = vunpack.c.l.b16 %v85
    %v101 = vpack.c.b16 %v98, %v97
    %v102 = vpack.c.b16 %v100, %v99
    %vm105 = vcmask 261120
    %v107 = vsel %vm105, %v81, 0
    %109 = vmatprep.subr.bf16.mxu0 0
    %110 = vmatpush1.bf16.msra.mxu0 %v101
    %111 = vmatprep.subr.bf16.mxu0 0
    %112 = vmatpush1.bf16.msra.mxu0 %v102
    %113 = vmatprep.subr.bf16.mxu0 0
    %114 = vmatpush1.bf16.msra.mxu0 0
    %115 = vmatprep.subr.bf16.mxu0 0
    %116 = vmatpush1.bf16.msra.mxu0 0
    %117 = vmatprep.subr.bf16.mxu0 0
    %118 = vmatpush1.bf16.msra.mxu0 0
    %119 = vmatprep.subr.bf16.mxu0 0
    %120 = vmatpush1.bf16.msra.mxu0 0
    %121 = vmatprep.subr.bf16.mxu0 0
    %122 = vmatpush1.bf16.msra.mxu0 0
    %123 = vmatprep.subr.bf16.mxu0 0
    %124 = vmatpush1.bf16.msra.mxu0 0
    %125 = vmatprep.subr.bf16.mxu0 0
    %126 = vmatpush1.bf16.msra.mxu0 0
    %127 = vmatprep.subr.bf16.mxu0 0
    %128 = vmatpush1.bf16.msra.mxu0 0
    %129 = vmatprep.subr.bf16.mxu0 0
    %130 = vmatpush1.bf16.msra.mxu0 0
    %131 = vmatprep.subr.bf16.mxu0 0
    %132 = vmatpush1.bf16.msra.mxu0 0
    %133 = vmatprep.subr.bf16.mxu0 0
    %134 = vmatpush1.bf16.msra.mxu0 0
    %135 = vmatprep.subr.bf16.mxu0 0
    %136 = vmatpush1.bf16.msra.mxu0 0
    %137 = vmatprep.subr.bf16.mxu0 0
    %138 = vmatpush1.bf16.msra.mxu0 0
    %139 = vmatprep.subr.bf16.mxu0 0
    %140 = vmatpush1.bf16.msra.mxu0 0
    %141 = vmatprep.mubr.bf16.mxu0 0
    %142 = vmatmul.mubr.bf16.gmra.mrb[0].mxu0 %v107
    %v143 = vpop.f32.mrb[0].mxu0
    %v144 = vadd.f32 %v91, %v143
    %v145 = vpop.f32.mrb[0].mxu0
    %v146 = vpop.f32.mrb[0].mxu0
    %v147 = vpop.f32.mrb[0].mxu0
    %148 = vdwg.mxu0
    %v149 = vmax.f32 %v144, 0.0
    %v150 = vpack.c.bf16 %v149, %v149
    %v151 = vld [vmem:[#allocation6] sm:$0xf]
    %v152 = vld [vmem:[#allocation6 + $0x4] sm:$0xf]
    %v153 = vld [vmem:[#allocation6 + $0x8] sm:$0xf]
    %v154 = vld [vmem:[#allocation6 + $0xc] sm:$0xf]
    %v155 = vld [vmem:[#allocation6 + $0x10] sm:$0xf]
    %v156 = vld [vmem:[#allocation6 + $0x14] sm:$0xf]
    %v157 = vld [vmem:[#allocation6 + $0x18] sm:$0xf]
    %v158 = vld [vmem:[#allocation6 + $0x1c] sm:$0xf]
    %v159 = vld [vmem:[#allocation6 + $0x20] sm:$0xf]
    %v160 = vld [vmem:[#allocation6 + $0x24] sm:$0xf]
    %v161 = vld [vmem:[#allocation6 + $0x28] sm:$0xf]
    %v162 = vld [vmem:[#allocation6 + $0x2c] sm:$0xf]
    %v163 = vld [vmem:[#allocation6 + $0x30] sm:$0xf]
    %v164 = vld [vmem:[#allocation6 + $0x34] sm:$0xf]
    %v165 = vld [vmem:[#allocation6 + $0x38] sm:$0xf]
    %v166 = vld [vmem:[#allocation6 + $0x3c] sm:$0xf]
    %v167 = vld [vmem:[%s4] sm:$0x1]
    %v169 = vlaneseq
    %v170 = vshrl.u32 %v169, 7
    %v171 = vsub.s32 0, %v170
    %v172 = vrot.slane %v167, %v171
    %v190 = vunpack.c.l.b16 %v151
    %v191 = vunpack.c.l.b16 %v152
    %v192 = vunpack.c.l.b16 %v153
    %v193 = vunpack.c.l.b16 %v154
    %v194 = vunpack.c.l.b16 %v155
    %v195 = vunpack.c.l.b16 %v156
    %v196 = vunpack.c.l.b16 %v157
    %v197 = vunpack.c.l.b16 %v158
    %v198 = vunpack.c.l.b16 %v159
    %v199 = vunpack.c.l.b16 %v160
    %v200 = vunpack.c.l.b16 %v161
    %v201 = vunpack.c.l.b16 %v162
    %v202 = vunpack.c.l.b16 %v163
    %v203 = vunpack.c.l.b16 %v164
    %v204 = vunpack.c.l.b16 %v165
    %v205 = vunpack.c.l.b16 %v166
    %v206 = vpack.c.b16 %v191, %v190
    %v207 = vpack.c.b16 %v193, %v192
    %v208 = vpack.c.b16 %v195, %v194
    %v209 = vpack.c.b16 %v197, %v196
    %v210 = vpack.c.b16 %v199, %v198
    %v211 = vpack.c.b16 %v201, %v200
    %v212 = vpack.c.b16 %v203, %v202
    %v213 = vpack.c.b16 %v205, %v204
    %222 = vmatprep.subr.bf16.mxu0 0
    %223 = vmatpush1.bf16.msra.mxu0 %v206
    %224 = vmatprep.subr.bf16.mxu0 0
    %225 = vmatpush1.bf16.msra.mxu0 %v207
    %226 = vmatprep.subr.bf16.mxu0 0
    %227 = vmatpush1.bf16.msra.mxu0 %v208
    %228 = vmatprep.subr.bf16.mxu0 0
    %229 = vmatpush1.bf16.msra.mxu0 %v209
    %230 = vmatprep.subr.bf16.mxu0 0
    %231 = vmatpush1.bf16.msra.mxu0 %v210
    %232 = vmatprep.subr.bf16.mxu0 0
    %233 = vmatpush1.bf16.msra.mxu0 %v211
    %234 = vmatprep.subr.bf16.mxu0 0
    %235 = vmatpush1.bf16.msra.mxu0 %v212
    %236 = vmatprep.subr.bf16.mxu0 0
    %237 = vmatpush1.bf16.msra.mxu0 %v213
    %238 = vmatprep.subr.bf16.mxu0 0
    %239 = vmatpush1.bf16.msra.mxu0 0
    %240 = vmatprep.subr.bf16.mxu0 0
    %241 = vmatpush1.bf16.msra.mxu0 0
    %242 = vmatprep.subr.bf16.mxu0 0
    %243 = vmatpush1.bf16.msra.mxu0 0
    %244 = vmatprep.subr.bf16.mxu0 0
    %245 = vmatpush1.bf16.msra.mxu0 0
    %246 = vmatprep.subr.bf16.mxu0 0
    %247 = vmatpush1.bf16.msra.mxu0 0
    %248 = vmatprep.subr.bf16.mxu0 0
    %249 = vmatpush1.bf16.msra.mxu0 0
    %250 = vmatprep.subr.bf16.mxu0 0
    %251 = vmatpush1.bf16.msra.mxu0 0
    %252 = vmatprep.subr.bf16.mxu0 0
    %253 = vmatpush1.bf16.msra.mxu0 0
    %254 = vmatprep.mubr.bf16.mxu0 0
    %255 = vmatmul.mubr.bf16.gmra.mrb[0].mxu0 %v150
    %v256 = vpop.f32.mrb[0].mxu0
    %v257 = vadd.f32 %v172, %v256
    %v258 = vpop.f32.mrb[0].mxu0
    %v259 = vpop.f32.mrb[0].mxu0
    %v260 = vpop.f32.mrb[0].mxu0
    %261 = vdwg.mxu0
    %v262 = vmax.f32 %v257, 0.0
    %v263 = vpack.c.bf16 %v262, %v262
    %v264 = vld [vmem:[#allocation7] sm:$0xf]
    %v265 = vld [vmem:[#allocation7 + $0x4] sm:$0xf]
    %v266 = vld [vmem:[#allocation7 + $0x8] sm:$0xf]
    %v267 = vld [vmem:[#allocation7 + $0xc] sm:$0xf]
    %v268 = vld [vmem:[#allocation7 + $0x10] sm:$0xf]
    %v269 = vld [vmem:[#allocation7 + $0x14] sm:$0xf]
    %v270 = vld [vmem:[#allocation7 + $0x18] sm:$0xf]
    %v271 = vld [vmem:[#allocation7 + $0x1c] sm:$0xf]
    %v272 = vld [vmem:[#allocation7 + $0x20] sm:$0xf]
    %v273 = vld [vmem:[#allocation7 + $0x24] sm:$0xf]
    %v274 = vld [vmem:[#allocation7 + $0x28] sm:$0xf]
    %v275 = vld [vmem:[#allocation7 + $0x2c] sm:$0xf]
    %v276 = vld [vmem:[#allocation7 + $0x30] sm:$0xf]
    %v277 = vld [vmem:[#allocation7 + $0x34] sm:$0xf]
    %v278 = vld [vmem:[#allocation7 + $0x38] sm:$0xf]
    %v279 = vld [vmem:[#allocation7 + $0x3c] sm:$0xf]
    %v280 = vld [vmem:[%s6] sm:$0x1]
    %v282 = vlaneseq
    %v283 = vshrl.u32 %v282, 7
    %v284 = vsub.s32 0, %v283
    %v285 = vrot.slane %v280, %v284
    %v303 = vunpack.c.l.b16 %v264
    %v304 = vunpack.c.l.b16 %v265
    %v305 = vunpack.c.l.b16 %v266
    %v306 = vunpack.c.l.b16 %v267
    %v307 = vunpack.c.l.b16 %v268
    %v308 = vunpack.c.l.b16 %v269
    %v309 = vunpack.c.l.b16 %v270
    %v310 = vunpack.c.l.b16 %v271
    %v311 = vunpack.c.l.b16 %v272
    %v312 = vunpack.c.l.b16 %v273
    %v313 = vunpack.c.l.b16 %v274
    %v314 = vunpack.c.l.b16 %v275
    %v315 = vunpack.c.l.b16 %v276
    %v316 = vunpack.c.l.b16 %v277
    %v317 = vunpack.c.l.b16 %v278
    %v318 = vunpack.c.l.b16 %v279
    %v319 = vpack.c.b16 %v304, %v303
    %v320 = vpack.c.b16 %v306, %v305
    %v321 = vpack.c.b16 %v308, %v307
    %v322 = vpack.c.b16 %v310, %v309
    %v323 = vpack.c.b16 %v312, %v311
    %v324 = vpack.c.b16 %v314, %v313
    %v325 = vpack.c.b16 %v316, %v315
    %v326 = vpack.c.b16 %v318, %v317
    %335 = vmatprep.subr.bf16.mxu0 0
    %336 = vmatpush1.bf16.msra.mxu0 %v319
    %337 = vmatprep.subr.bf16.mxu0 0
    %338 = vmatpush1.bf16.msra.mxu0 %v320
    %339 = vmatprep.subr.bf16.mxu0 0
    %340 = vmatpush1.bf16.msra.mxu0 %v321
    %341 = vmatprep.subr.bf16.mxu0 0
    %342 = vmatpush1.bf16.msra.mxu0 %v322
    %343 = vmatprep.subr.bf16.mxu0 0
    %344 = vmatpush1.bf16.msra.mxu0 %v323
    %345 = vmatprep.subr.bf16.mxu0 0
    %346 = vmatpush1.bf16.msra.mxu0 %v324
    %347 = vmatprep.subr.bf16.mxu0 0
    %348 = vmatpush1.bf16.msra.mxu0 %v325
    %349 = vmatprep.subr.bf16.mxu0 0
    %350 = vmatpush1.bf16.msra.mxu0 %v326
    %351 = vmatprep.subr.bf16.mxu0 0
    %352 = vmatpush1.bf16.msra.mxu0 0
    %353 = vmatprep.subr.bf16.mxu0 0
    %354 = vmatpush1.bf16.msra.mxu0 0
    %355 = vmatprep.subr.bf16.mxu0 0
    %356 = vmatpush1.bf16.msra.mxu0 0
    %357 = vmatprep.subr.bf16.mxu0 0
    %358 = vmatpush1.bf16.msra.mxu0 0
    %359 = vmatprep.subr.bf16.mxu0 0
    %360 = vmatpush1.bf16.msra.mxu0 0
    %361 = vmatprep.subr.bf16.mxu0 0
    %362 = vmatpush1.bf16.msra.mxu0 0
    %363 = vmatprep.subr.bf16.mxu0 0
    %364 = vmatpush1.bf16.msra.mxu0 0
    %365 = vmatprep.subr.bf16.mxu0 0
    %366 = vmatpush1.bf16.msra.mxu0 0
    %367 = vmatprep.mubr.bf16.mxu0 0
    %368 = vmatmul.mubr.bf16.gmra.mrb[0].mxu0 %v263
    %v369 = vpop.f32.mrb[0].mxu0
    %v370 = vadd.f32 %v285, %v369
    %v371 = vpop.f32.mrb[0].mxu0
    %v372 = vpop.f32.mrb[0].mxu0
    %v373 = vpop.f32.mrb[0].mxu0
    %374 = vdwg.mxu0
    %v375 = vpack.c.bf16 %v370, %v370
    %376 = vst [vmem:[%s7] sm:$0xf] %v375
    // Predicated region
    $region46: #{_forward_impl.1} parent=1 // pred_check
      _
    $region47: #{_forward_impl.1} parent=1 // pred_check_branch
      %378 = sbr.rel (0) target = $region49
    $region48: #{_forward_impl.1} parent=1 // pred_region
      _
    $region49: #{_forward_impl.1} parent=1 // pred_fallthru
      _
    // Predicated region
    $region50: #{_forward_impl.1} parent=1 // pred_check
      _
    $region51: #{_forward_impl.1} parent=1 // pred_check_branch
      %380 = sbr.rel (0) target = $region53
    $region52: #{_forward_impl.1} parent=1 // pred_region
      _
    $region53: #{_forward_impl.1} parent=1 // pred_fallthru
      _
    %381 = vsyncpa [#allocation3], 1
    %382 = vsyncpa [#allocation5], 1
    %383 = vsyncpa [#allocation8], 1

</llo_original>
